<compile_context>
chip_gen: v7x
topology: tpu7x:2x2x1
jax: 0.10.0
libtpu: 0.0.40
codegen_flags: <defaults>
</compile_context>

<pallas_src>
import functools

import jax
import jax.numpy as jnp
from jax import lax
from jax.experimental import pallas as pl
from jax.experimental.pallas import tpu as pltpu


def _mha_causal_kernel(x_ref, w_ref, o_ref, *, num_heads, d_out):
    # x_ref: (1, T, d_in)        current batch element
    # w_ref: (d_in, 3*H*d_out)   fused [Q_all_heads | K_all_heads | V_all_heads]
    # o_ref: (1, T, H*d_out)     lane-dense output, heads concatenated on lanes
    x = x_ref[0]                      # (T, d_in)
    w = w_ref[...]                    # (d_in, 3*H*d_out)
    T = x.shape[0]
    H = num_heads
    hd = H * d_out

    # One lane-dense MXU matmul produces Q, K, V for every head at once.
    qkv = jnp.dot(x, w, preferred_element_type=jnp.float32)      # (T, 3*H*d_out)

    # Scale Q up front instead of scaling each (T, T) score tile.
    scale = jnp.float32(1.0) / jnp.sqrt(jnp.float32(d_out))
    q_all = qkv[:, :hd] * scale
    k_all = qkv[:, hd:2 * hd]
    v_all = qkv[:, 2 * hd:]

    # Per-head score matmuls (static unrolled; slices of a VMEM value are free),
    # stacked along sublanes into one (H*T, T) slab so the whole softmax stage
    # runs once for all heads.
    s_tiles = []
    for h in range(H):
        lo, hi = h * d_out, (h + 1) * d_out
        s_tiles.append(jnp.dot(q_all[:, lo:hi], k_all[:, lo:hi].T,
                               preferred_element_type=jnp.float32))   # (T, T)
    s = jnp.concatenate(s_tiles, axis=0)                              # (H*T, T)

    # Causal mask for the stacked slab: query index is (row % T).
    row = lax.broadcasted_iota(jnp.int32, (H * T, T), 0) % T
    col = lax.broadcasted_iota(jnp.int32, (H * T, T), 1)
    s = jnp.where(col > row, -jnp.inf, s)

    # Numerically-stable softmax, one reduction chain shared by all heads;
    # diagonal is always unmasked so rows never become all -inf (no NaNs).
    m = jnp.max(s, axis=-1, keepdims=True)
    e = jnp.exp(s - m)
    denom = jnp.sum(e, axis=-1, keepdims=True)
    attn = e * pl.reciprocal(denom, approx=True)                      # (H*T, T)

    # Dropout is identity (dropout=0.0 / eval mode).
    outs = []
    for h in range(H):
        a_h = attn[h * T:(h + 1) * T, :]                              # (T, T)
        v_h = v_all[:, h * d_out:(h + 1) * d_out]                     # (T, d_out)
        outs.append(jnp.dot(a_h, v_h, preferred_element_type=jnp.float32))

    # Single lane-dense store of all heads, already in torch.cat order.
    o_ref[0] = jnp.concatenate(outs, axis=-1).astype(o_ref.dtype)


def multi_head_attention_wrapper(x, wq, wk, wv):
    """x: (B, T, d_in); wq/wk/wv: (H, d_in, d_out). Returns (B, T, H*d_out)."""
    B, T, d_in = x.shape
    H, _, d_out = wq.shape
    hd = H * d_out

    # Pack per-head Q/K/V weights into one (d_in, 3*H*d_out) matrix (head-major
    # along lanes) so the kernel runs one lane-dense projection matmul.
    def _flat(w):  # (H, d_in, d_out) -> (d_in, H*d_out)
        return jnp.transpose(w, (1, 0, 2)).reshape(d_in, hd)

    w_all = jnp.concatenate([_flat(wq), _flat(wk), _flat(wv)], axis=-1)

    kernel = functools.partial(_mha_causal_kernel, num_heads=H, d_out=d_out)
    return pl.pallas_call(
        kernel,
        out_shape=jax.ShapeDtypeStruct((B, T, hd), jnp.float32),
        grid_spec=pltpu.PrefetchScalarGridSpec(
            num_scalar_prefetch=0,
            grid=(B,),
            in_specs=[
                pl.BlockSpec((1, T, d_in), lambda b: (b, 0, 0)),
                pl.BlockSpec((d_in, 3 * hd), lambda b: (0, 0)),
            ],
            out_specs=pl.BlockSpec((1, T, hd), lambda b: (b, 0, 0)),
        ),
        compiler_params=pltpu.CompilerParams(
            dimension_semantics=("parallel",)),
    )(x, w_all)


def _reference(x, wq, wk, wv):
    """Pure-JAX reference of MultiHeadAttentionWrapper.forward (dropout=0)."""
    B, T, d_in = x.shape
    H, _, d_out = wq.shape
    outs = []
    for h in range(H):
        q = x @ wq[h]
        k = x @ wk[h]
        v = x @ wv[h]
        s = jnp.einsum("btd,bsd->bts", q, k)
        mask = jnp.triu(jnp.ones((T, T), bool), k=1)
        s = jnp.where(mask[None], -jnp.inf, s) / jnp.sqrt(jnp.float32(d_out))
        w = jax.nn.softmax(s, axis=-1)
        outs.append(jnp.einsum("bts,bsd->btd", w, v))
    return jnp.concatenate(outs, axis=-1)


if __name__ == "__main__":
    # shapes implied by the module's example usage:
    # batch=2, context_length (T)=6, d_in=3, d_out=2, num_heads=2, dropout=0.0
    B, T, d_in, d_out, H = 2, 6, 3, 2, 2

    inputs = jnp.array(
        [[0.43, 0.15, 0.89],
         [0.55, 0.87, 0.66],
         [0.55, 0.87, 0.66],
         [0.22, 0.58, 0.33],
         [0.77, 0.25, 0.10],
         [0.05, 0.80, 0.55]], dtype=jnp.float32)
    x = jnp.stack((inputs, inputs), axis=0)  # (B, T, d_in)

    # deterministic parameter init (nn.Linear-style uniform(-1/sqrt(d_in), 1/sqrt(d_in)))
    key = jax.random.PRNGKey(0)
    kq, kk, kv = jax.random.split(key, 3)
    bound = 1.0 / jnp.sqrt(jnp.float32(d_in))
    wq = jax.random.uniform(kq, (H, d_in, d_out), jnp.float32, -bound, bound)
    wk = jax.random.uniform(kk, (H, d_in, d_out), jnp.float32, -bound, bound)
    wv = jax.random.uniform(kv, (H, d_in, d_out), jnp.float32, -bound, bound)

    out = multi_head_attention_wrapper(x, wq, wk, wv)
    out = jax.block_until_ready(out)

    ref = _reference(x, wq, wk, wv)
    assert out.shape == (B, T, H * d_out)
    # tolerance loosened slightly vs f32-exact to accommodate the EUP
    # approximate reciprocal in the softmax normalization (approx=True)
    assert jnp.allclose(out, ref, atol=1e-3, rtol=1e-3), (
        f"max abs err {float(jnp.max(jnp.abs(out - ref)))}")

    print("KERNEL_OK")
</pallas_src>

<mosaic_0001>
module attributes {stable_mosaic.version = 11 : i64} {
  func.func @_mha_causal_kernel(%arg0: i32, %arg1: memref<1x6x3xf32, #tpu.memory_space<vmem>>, %arg2: memref<3x12xf32, #tpu.memory_space<vmem>>, %arg3: memref<1x6x4xf32, #tpu.memory_space<vmem>>) attributes {dimension_semantics = [#tpu.dimension_semantics<parallel>], iteration_bounds = array<i64: 2>, scalar_prefetch = 0 : i64, scratch_operands = 0 : i64, tpu.core_type = #tpu.core_type<tc>, window_params = [{transform_indices = @transform_0, window_bounds = array<i64: 1, 6, 3>}, {pipeline_mode = #tpu.pipeline_mode<synchronous>, transform_indices = @transform_1, window_bounds = array<i64: 3, 12>}, {transform_indices = @transform_2, window_bounds = array<i64: 1, 6, 4>}]} {
    %c0 = arith.constant 0 : index
    %c0_0 = arith.constant 0 : index
    %c0_1 = arith.constant 0 : index
    %0 = vector.load %arg1[%c0, %c0_0, %c0_1] : memref<1x6x3xf32, #tpu.memory_space<vmem>>, vector<1x6x3xf32>
    %1 = vector.shape_cast %0 : vector<1x6x3xf32> to vector<6x3xf32>
    %c0_2 = arith.constant 0 : index
    %c0_3 = arith.constant 0 : index
    %2 = vector.load %arg2[%c0_2, %c0_3] : memref<3x12xf32, #tpu.memory_space<vmem>>, vector<3x12xf32>
    %cst = arith.constant dense<0.000000e+00> : vector<6x12xf32>
    %3 = tpu.matmul %1, %2, %cst {dimension_numbers = #tpu.dot_dimension_numbers<[1], [0], [0], [1], [0, 0, 1, 1], [], []>} : vector<6x3xf32>, vector<3x12xf32>, vector<6x12xf32> -> vector<6x12xf32>
    %cst_4 = arith.constant 2.000000e+00 : f32
    %4 = math.sqrt %cst_4 : f32
    %cst_5 = arith.constant 1.000000e+00 : f32
    %5 = arith.divf %cst_5, %4 : f32
    %6 = vector.extract_strided_slice %3 {offsets = [0, 0], sizes = [6, 4], strides = [1, 1]} : vector<6x12xf32> to vector<6x4xf32>
    %7 = vector.broadcast %5 : f32 to vector<6x4xf32>
    %8 = arith.mulf %6, %7 : vector<6x4xf32>
    %9 = vector.extract_strided_slice %3 {offsets = [0, 4], sizes = [6, 4], strides = [1, 1]} : vector<6x12xf32> to vector<6x4xf32>
    %10 = vector.extract_strided_slice %3 {offsets = [0, 8], sizes = [6, 4], strides = [1, 1]} : vector<6x12xf32> to vector<6x4xf32>
    %11 = vector.extract_strided_slice %8 {offsets = [0, 0], sizes = [6, 2], strides = [1, 1]} : vector<6x4xf32> to vector<6x2xf32>
    %12 = vector.extract_strided_slice %9 {offsets = [0, 0], sizes = [6, 2], strides = [1, 1]} : vector<6x4xf32> to vector<6x2xf32>
    %13 = tpu.transpose %12, [1, 0] : vector<6x2xf32> -> vector<2x6xf32>
    %cst_6 = arith.constant dense<0.000000e+00> : vector<6x6xf32>
    %14 = tpu.matmul %11, %13, %cst_6 {dimension_numbers = #tpu.dot_dimension_numbers<[1], [0], [0], [1], [0, 0, 1, 1], [], []>} : vector<6x2xf32>, vector<2x6xf32>, vector<6x6xf32> -> vector<6x6xf32>
    %15 = vector.extract_strided_slice %8 {offsets = [0, 2], sizes = [6, 2], strides = [1, 1]} : vector<6x4xf32> to vector<6x2xf32>
    %16 = vector.extract_strided_slice %9 {offsets = [0, 2], sizes = [6, 2], strides = [1, 1]} : vector<6x4xf32> to vector<6x2xf32>
    %17 = tpu.transpose %16, [1, 0] : vector<6x2xf32> -> vector<2x6xf32>
    %cst_7 = arith.constant dense<0.000000e+00> : vector<6x6xf32>
    %18 = tpu.matmul %15, %17, %cst_7 {dimension_numbers = #tpu.dot_dimension_numbers<[1], [0], [0], [1], [0, 0, 1, 1], [], []>} : vector<6x2xf32>, vector<2x6xf32>, vector<6x6xf32> -> vector<6x6xf32>
    %19 = tpu.concatenate %14, %18 in 0 : vector<6x6xf32>, vector<6x6xf32> -> vector<12x6xf32>
    %20 = tpu.iota {dimensions = array<i32: 0>} : vector<12x6xi32>
    %c6_i32 = arith.constant 6 : i32
    %c0_i32 = arith.constant 0 : i32
    %21 = arith.cmpi eq, %c6_i32, %c0_i32 : i32
    %c1_i32 = arith.constant 1 : i32
    %22 = arith.select %21, %c1_i32, %c6_i32 : i32
    %23 = vector.broadcast %22 : i32 to vector<12x6xi32>
    %24 = arith.remsi %20, %23 : vector<12x6xi32>
    %c0_i32_8 = arith.constant 0 : i32
    %25 = vector.broadcast %c0_i32_8 : i32 to vector<12x6xi32>
    %26 = arith.cmpi ne, %24, %25 : vector<12x6xi32>
    %c0_i32_9 = arith.constant 0 : i32
    %27 = vector.broadcast %c0_i32_9 : i32 to vector<12x6xi32>
    %28 = arith.cmpi slt, %24, %27 : vector<12x6xi32>
    %c0_i32_10 = arith.constant 0 : i32
    %29 = arith.cmpi slt, %22, %c0_i32_10 : i32
    %30 = vector.broadcast %29 : i1 to vector<12x6xi1>
    %31 = vector.broadcast %30 : vector<12x6xi1> to vector<12x6xi1>
    %32 = arith.xori %28, %31 : vector<12x6xi1>
    %33 = arith.andi %32, %26 : vector<12x6xi1>
    %34 = vector.broadcast %22 : i32 to vector<12x6xi32>
    %35 = arith.addi %24, %34 : vector<12x6xi32>
    %36 = arith.select %33, %35, %24 : vector<12x6xi1>, vector<12x6xi32>
    %37 = tpu.iota {dimensions = array<i32: 1>} : vector<12x6xi32>
    %38 = arith.cmpi sgt, %37, %36 : vector<12x6xi32>
    %cst_11 = arith.constant 0xFF800000 : f32
    %39 = vector.broadcast %cst_11 : f32 to vector<12x6xf32>
    %40 = arith.select %38, %39, %19 : vector<12x6xi1>, vector<12x6xf32>
    %cst_12 = arith.constant dense<0xFF800000> : vector<12xf32>
    %41 = vector.multi_reduction <maximumf>, %40, %cst_12 [1] : vector<12x6xf32> to vector<12xf32>
    %42 = vector.shape_cast %41 : vector<12xf32> to vector<12x1xf32>
    %43 = vector.broadcast %42 : vector<12x1xf32> to vector<12x6xf32>
    %44 = arith.subf %40, %43 : vector<12x6xf32>
    %45 = math.exp %44 : vector<12x6xf32>
    %cst_13 = arith.constant dense<0.000000e+00> : vector<12xf32>
    %46 = vector.multi_reduction <add>, %45, %cst_13 [1] : vector<12x6xf32> to vector<12xf32>
    %47 = vector.shape_cast %46 : vector<12xf32> to vector<12x1xf32>
    %48 = tpu.reciprocal %47 {approx = true} : vector<12x1xf32> -> vector<12x1xf32>
    %49 = vector.broadcast %48 : vector<12x1xf32> to vector<12x6xf32>
    %50 = arith.mulf %45, %49 : vector<12x6xf32>
    %51 = vector.extract_strided_slice %50 {offsets = [0, 0], sizes = [6, 6], strides = [1, 1]} : vector<12x6xf32> to vector<6x6xf32>
    %52 = vector.extract_strided_slice %10 {offsets = [0, 0], sizes = [6, 2], strides = [1, 1]} : vector<6x4xf32> to vector<6x2xf32>
    %cst_14 = arith.constant dense<0.000000e+00> : vector<6x2xf32>
    %53 = tpu.matmul %51, %52, %cst_14 {dimension_numbers = #tpu.dot_dimension_numbers<[1], [0], [0], [1], [0, 0, 1, 1], [], []>} : vector<6x6xf32>, vector<6x2xf32>, vector<6x2xf32> -> vector<6x2xf32>
    %54 = vector.extract_strided_slice %50 {offsets = [6, 0], sizes = [6, 6], strides = [1, 1]} : vector<12x6xf32> to vector<6x6xf32>
    %55 = vector.extract_strided_slice %10 {offsets = [0, 2], sizes = [6, 2], strides = [1, 1]} : vector<6x4xf32> to vector<6x2xf32>
    %cst_15 = arith.constant dense<0.000000e+00> : vector<6x2xf32>
    %56 = tpu.matmul %54, %55, %cst_15 {dimension_numbers = #tpu.dot_dimension_numbers<[1], [0], [0], [1], [0, 0, 1, 1], [], []>} : vector<6x6xf32>, vector<6x2xf32>, vector<6x2xf32> -> vector<6x2xf32>
    %57 = tpu.concatenate %53, %56 in 1 : vector<6x2xf32>, vector<6x2xf32> -> vector<6x4xf32>
    %c0_16 = arith.constant 0 : index
    %c0_17 = arith.constant 0 : index
    %c0_18 = arith.constant 0 : index
    %58 = vector.load %arg3[%c0_16, %c0_17, %c0_18] : memref<1x6x4xf32, #tpu.memory_space<vmem>>, vector<1x6x4xf32>
    %59 = vector.shape_cast %58 : vector<1x6x4xf32> to vector<6x4xf32>
    %60 = vector.shape_cast %57 : vector<6x4xf32> to vector<1x6x4xf32>
    tpu.vector_store %arg3[%c0_16, %c0_17, %c0_18], %60 {strides = array<i32>} : memref<1x6x4xf32, #tpu.memory_space<vmem>>, vector<1x6x4xf32>,
    return
  }
  func.func @transform_0(%arg0: i32) -> (i32, i32, i32) {
    %c0_i32 = arith.constant 0 : i32
    %c0_i32_0 = arith.constant 0 : i32
    %c0_i32_1 = arith.constant 0 : i32
    return %arg0, %c0_i32, %c0_i32_0 : i32, i32, i32
  }
  func.func @transform_1(%arg0: i32) -> (i32, i32) {
    %c0_i32 = arith.constant 0 : i32
    %c0_i32_0 = arith.constant 0 : i32
    %c0_i32_1 = arith.constant 0 : i32
    return %c0_i32, %c0_i32_0 : i32, i32
  }
  func.func @transform_2(%arg0: i32) -> (i32, i32, i32) {
    %c0_i32 = arith.constant 0 : i32
    %c0_i32_0 = arith.constant 0 : i32
    %c0_i32_1 = arith.constant 0 : i32
    return %arg0, %c0_i32, %c0_i32_0 : i32, i32, i32
  }
}

</mosaic_0001>

<llo_original>
// kernel: tpu_custom_call.1
$region0: #{tpu_custom_call.1}
  #allocation0 [shape = 'u32[]', space=smem, size = 0x4, offset = 0x4, fixed_abs, tag = 'smem constant byte address 0x4 - core index']
  #allocation1 [shape = 'u32[144,128]{1,0:T(1,128)}', space=vmem, size = 0x12000, scoped, tag = 'internal scratch']
  %s0 = inlined_call_operand.vmem [shape: f32[2,6,3], index: 0, kind: input, shape index: {}]
  %s1 = inlined_call_operand.vmem [shape: f32[3,12], index: 1, kind: input, shape index: {}]
  %s2 = inlined_call_operand.vmem [shape: f32[2,6,4], index: 2, kind: output, shape index: {}]
  %s3 = sld [smem:[#allocation0]]
  $region41: #{tpu_custom_call.1} parent=0
    _
  %s5 = ssub.s32 1, %s3
  %s6 = scalar_select 0, %s5, %s3
  loop: start=0, step=1, limit=4
  $region2: #{tpu_custom_call.1} parent=0 // loop_pre_header
    _
  $region3: #{tpu_custom_call.1} parent=0 // loop_header
    %s8 = sphi 0, %s12
    %p9 = scmp.ge.s32.totalorder %s8, 4
    %s18 = sphi 0, %s20
    %s21 = sphi 0, %s18
    %s22 = sphi 0, %s21
    %s38 = sphi 0, %s22
    %s42 = sphi 0, %s42
    %s44 = sphi 0, %s42
    %s45 = sphi 0, %s44
    %s59 = sphi 0, %s45
    %s65 = sphi 0, %s67
    %s68 = sphi 0, %s65
    %s69 = sphi 0, %s68
    %s85 = sphi 0, %s69
  $region4: #{tpu_custom_call.1} parent=0 // loop_header_branch
    %11 = sbr.rel (%p9) target = $region8
  $region5: #{tpu_custom_call.1} parent=0 // loop_body
    %s13 = ssub.s32 %s8, 1
    %s14 = ssub.s32 %s8, 2
    %s15 = sadd.s32 %s8, 1
    %s16 = ssub.s32 %s8, %s15
    %p17 = scmp.eq.s32.totalorder %s16, 0
    %s19 = sadd.s32 %s18, 1
    %s20 = scalar_select %p17, %s18, %s19
    %p23 = pneg %p17
    %p24 = scmp.eq.s32.totalorder %s8, 1
    %p25 = por %p23, %p24
    %p26 = scmp.ne.s32.totalorder %s18, %s21
    %p27 = scmp.eq.s32.totalorder %s8, 0
    %p28 = por %p26, %p27
    %p29 = scmp.ne.s32.totalorder %s18, %s21
    %p30 = scmp.eq.s32.totalorder %s13, 1
    %p31 = por %p29, %p30
    %p32 = scmp.ne.s32.totalorder %s21, %s22
    %p33 = scmp.eq.s32.totalorder %s13, 0
    %p34 = por %p32, %p33
    %p35 = scmp.ne.s32.totalorder %s21, %s22
    %p36 = scmp.eq.s32.totalorder %s14, 1
    %p37 = por %p35, %p36
    %p39 = scmp.ne.s32.totalorder %s22, %s38
    %p40 = scmp.eq.s32.totalorder %s14, 0
    %p41 = por %p39, %p40
    %s43 = sadd.s32 %s42, 1
    %p46 = scmp.eq.s32.totalorder %s8, 1
    %p47 = scmp.ne.s32.totalorder %s42, %s44
    %p48 = scmp.eq.s32.totalorder %s8, 0
    %p49 = por %p47, %p48
    %p50 = scmp.ne.s32.totalorder %s42, %s44
    %p51 = scmp.eq.s32.totalorder %s13, 1
    %p52 = por %p50, %p51
    %p53 = scmp.ne.s32.totalorder %s44, %s45
    %p54 = scmp.eq.s32.totalorder %s13, 0
    %p55 = por %p53, %p54
    %p56 = scmp.ne.s32.totalorder %s44, %s45
    %p57 = scmp.eq.s32.totalorder %s14, 1
    %p58 = por %p56, %p57
    %p60 = scmp.ne.s32.totalorder %s45, %s59
    %p61 = scmp.eq.s32.totalorder %s14, 0
    %p62 = por %p60, %p61
    %s63 = ssub.s32 %s8, %s15
    %p64 = scmp.eq.s32.totalorder %s63, 0
    %s66 = sadd.s32 %s65, 1
    %s67 = scalar_select %p64, %s65, %s66
    %p70 = pneg %p64
    %p71 = scmp.eq.s32.totalorder %s8, 1
    %p72 = por %p70, %p71
    %p73 = scmp.ne.s32.totalorder %s65, %s68
    %p74 = scmp.eq.s32.totalorder %s8, 0
    %p75 = por %p73, %p74
    %p76 = scmp.ne.s32.totalorder %s65, %s68
    %p77 = scmp.eq.s32.totalorder %s13, 1
    %p78 = por %p76, %p77
    %p79 = scmp.ne.s32.totalorder %s68, %s69
    %p80 = scmp.eq.s32.totalorder %s13, 0
    %p81 = por %p79, %p80
    %p82 = scmp.ne.s32.totalorder %s68, %s69
    %p83 = scmp.eq.s32.totalorder %s14, 1
    %p84 = por %p82, %p83
    %p86 = scmp.ne.s32.totalorder %s69, %s85
    %p87 = scmp.eq.s32.totalorder %s14, 0
    %p88 = por %p86, %p87
    %p89 = scmp.le.s32.totalorder 1, %s8
    %p90 = scmp.lt.s32.totalorder %s8, 3
    %p91 = pnand %p89, %p90
    %p92 = pneg %p91
    // Predicated region
    $region9: #{tpu_custom_call.1} parent=5 // pred_check
      _
    $region10: #{tpu_custom_call.1} parent=5 // pred_check_branch
      %94 = sbr.rel (%p91) target = $region12
    $region11: #{tpu_custom_call.1} parent=5 // pred_region
      %s95 = ssub.s32 %s8, 1
      // Predicated region
      $region13: #{tpu_custom_call.1} parent=11 // pred_check
        %p96 = pneg %p55
      $region14: #{tpu_custom_call.1} parent=11 // pred_check_branch
        %98 = sbr.rel (%p96) target = $region16
      $region15: #{tpu_custom_call.1} parent=11 // pred_region
        _
      $region16: #{tpu_custom_call.1} parent=11 // pred_fallthru
        _
    $region12: #{tpu_custom_call.1} parent=5 // pred_fallthru
      _
    %p99 = scmp.lt.s32.totalorder %s8, 2
    // Predicated region
    $region17: #{tpu_custom_call.1} parent=5 // pred_check
      %p100 = pneg %p99
    $region18: #{tpu_custom_call.1} parent=5 // pred_check_branch
      %102 = sbr.rel (%p100) target = $region20
    $region19: #{tpu_custom_call.1} parent=5 // pred_region
      // Predicated region
      $region21: #{tpu_custom_call.1} parent=19 // pred_check
        %p103 = pneg %p28
      $region22: #{tpu_custom_call.1} parent=19 // pred_check_branch
        %105 = sbr.rel (%p103) target = $region24
      $region23: #{tpu_custom_call.1} parent=19 // pred_region
        %p106 = scmp.lt.s32.totalorder %s8, 1
        %s107 = scalar_select %p106, %s8, 1
        %s108 = smul.addr %s107, 8
        %s109 = scalar_lea.vmem %s0, %s108
      $region24: #{tpu_custom_call.1} parent=19 // pred_fallthru
        _
    $region20: #{tpu_custom_call.1} parent=5 // pred_fallthru
      _
    %p110 = scmp.le.s32.totalorder 1, %s8
    %p111 = scmp.lt.s32.totalorder %s8, 3
    %p112 = pnand %p110, %p111
    %p113 = pneg %p112
    // Predicated region
    $region25: #{tpu_custom_call.1} parent=5 // pred_check
      _
    $region26: #{tpu_custom_call.1} parent=5 // pred_check_branch
      %115 = sbr.rel (%p112) target = $region28
    $region27: #{tpu_custom_call.1} parent=5 // pred_region
      %s116 = ssub.s32 %s8, 1
      %p117 = scmp.lt.s32.totalorder %s13, 1
      %s118 = scalar_select %p117, %s13, 1
      %s119 = smul.addr %s118, 8
      %s120 = scalar_lea.vmem %s0, %s119
      %p121 = pneg %p34
      %p122 = pneg %p31
      %p123 = pneg %p55
      %p124 = pneg %p52
      %p125 = pneg %p81
      %p126 = pneg %p78
      %p127 = scmp.lt.s32.totalorder %s13, 1
      %s128 = scalar_select %p127, %s13, 1
      %s129 = smul.addr %s128, 8
      %s130 = scalar_lea.vmem %s2, %s129
      %p131 = scmp.lt.s32.totalorder %s13, 1
      %s132 = scalar_select %p131, %s13, 1
      %s133 = smul.addr %s132, 8
      %s134 = scalar_lea.vmem %s0, %s133
      %p135 = scmp.lt.s32.totalorder %s13, 1
      %s136 = scalar_select %p135, %s13, 1
      %s137 = smul.addr %s136, 8
      %s138 = scalar_lea.vmem %s2, %s137
      %v139 = vld [vmem:[%s134] sm:$0x3f]
      %v140 = vld [vmem:[%s1] sm:$0x7]
      %vm141 = vcmask 23552
      %v143 = vsel %vm141, %v139, 0
      %vm145 = vcmask 1042432
      %v147 = vsel %vm145, %v140, 0
      %149 = vmatprep.subr.mxu0 0.0
      %150 = vmatpush1.msra.mxu0 %v147
      %151 = vmatprep.subr.mxu0 0.0
      %152 = vmatpush1.msra.mxu0 0.0
      %153 = vmatprep.subr.mxu0 0.0
      %154 = vmatpush1.msra.mxu0 0.0
      %155 = vmatprep.subr.mxu0 0.0
      %156 = vmatpush1.msra.mxu0 0.0
      %157 = vmatprep.subr.mxu0 0.0
      %158 = vmatpush1.msra.mxu0 0.0
      %159 = vmatprep.subr.mxu0 0.0
      %160 = vmatpush1.msra.mxu0 0.0
      %161 = vmatprep.subr.mxu0 0.0
      %162 = vmatpush1.msra.mxu0 0.0
      %163 = vmatprep.subr.mxu0 0.0
      %164 = vmatpush1.msra.mxu0 0.0
      %165 = vmatprep.subr.mxu0 0.0
      %166 = vmatpush1.msra.mxu0 0.0
      %167 = vmatprep.subr.mxu0 0.0
      %168 = vmatpush1.msra.mxu0 0.0
      %169 = vmatprep.subr.mxu0 0.0
      %170 = vmatpush1.msra.mxu0 0.0
      %171 = vmatprep.subr.mxu0 0.0
      %172 = vmatpush1.msra.mxu0 0.0
      %173 = vmatprep.subr.mxu0 0.0
      %174 = vmatpush1.msra.mxu0 0.0
      %175 = vmatprep.subr.mxu0 0.0
      %176 = vmatpush1.msra.mxu0 0.0
      %177 = vmatprep.subr.mxu0 0.0
      %178 = vmatpush1.msra.mxu0 0.0
      %179 = vmatprep.subr.mxu0 0.0
      %180 = vmatpush1.msra.mxu0 0.0
      %181 = vmatprep.subr.mxu0 0.0
      %182 = vmatpush1.msra.mxu0 0.0
      %183 = vmatprep.subr.mxu0 0.0
      %184 = vmatpush1.msra.mxu0 0.0
      %185 = vmatprep.subr.mxu0 0.0
      %186 = vmatpush1.msra.mxu0 0.0
      %187 = vmatprep.subr.mxu0 0.0
      %188 = vmatpush1.msra.mxu0 0.0
      %189 = vmatprep.subr.mxu0 0.0
      %190 = vmatpush1.msra.mxu0 0.0
      %191 = vmatprep.subr.mxu0 0.0
      %192 = vmatpush1.msra.mxu0 0.0
      %193 = vmatprep.subr.mxu0 0.0
      %194 = vmatpush1.msra.mxu0 0.0
      %195 = vmatprep.subr.mxu0 0.0
      %196 = vmatpush1.msra.mxu0 0.0
      %197 = vmatprep.subr.mxu0 0.0
      %198 = vmatpush1.msra.mxu0 0.0
      %199 = vmatprep.subr.mxu0 0.0
      %200 = vmatpush1.msra.mxu0 0.0
      %201 = vmatprep.subr.mxu0 0.0
      %202 = vmatpush1.msra.mxu0 0.0
      %203 = vmatprep.subr.mxu0 0.0
      %204 = vmatpush1.msra.mxu0 0.0
      %205 = vmatprep.subr.mxu0 0.0
      %206 = vmatpush1.msra.mxu0 0.0
      %207 = vmatprep.subr.mxu0 0.0
      %208 = vmatpush1.msra.mxu0 0.0
      %209 = vmatprep.subr.mxu0 0.0
      %210 = vmatpush1.msra.mxu0 0.0
      %211 = vmatprep.subr.mxu0 0.0
      %212 = vmatpush1.msra.mxu0 0.0
      %213 = vmatprep.mubr.f32.mxu0 0.0
      %214 = vmatmul.mubr.f32.gmra.mrb[0].mxu0 %v143
      %v215 = vpop.f32.mrb[0].mxu0
      %v216 = vadd.f32 0.0, %v215
      %v217 = vpop.f32.mrb[0].mxu0
      %218 = vdwg.mxu0
      %v219 = vmul.f32 %v216, 0.70710677
      %221 = vrot.lane.b32.xlu0 %v216, 124
      %v222 = vpop.permute.xlu0 %221
      %vm223 = vcmask 15360
      %v225 = vsel %vm223, %v219, 0
      %v227 = vsel %vm223, %v222, 0
      %229 = vmatprep.subr.mxu0 0.0
      %230 = vmatpush1.xpose.msra.mxu0 %v227
      %231 = vmatprep.subr.mxu0 0.0
      %232 = vmatpush1.xpose.msra.mxu0 0.0
      %233 = vmatprep.subr.mxu0 0.0
      %234 = vmatpush1.xpose.msra.mxu0 0.0
      %235 = vmatprep.subr.mxu0 0.0
      %236 = vmatpush1.xpose.msra.mxu0 0.0
      %237 = vmatprep.subr.mxu0 0.0
      %238 = vmatpush1.xpose.msra.mxu0 0.0
      %239 = vmatprep.subr.mxu0 0.0
      %240 = vmatpush1.xpose.msra.mxu0 0.0
      %241 = vmatprep.subr.mxu0 0.0
      %242 = vmatpush1.xpose.msra.mxu0 0.0
      %243 = vmatprep.subr.mxu0 0.0
      %244 = vmatpush1.xpose.msra.mxu0 0.0
      %245 = vmatprep.subr.mxu0 0.0
      %246 = vmatpush1.xpose.msra.mxu0 0.0
      %247 = vmatprep.subr.mxu0 0.0
      %248 = vmatpush1.xpose.msra.mxu0 0.0
      %249 = vmatprep.subr.mxu0 0.0
      %250 = vmatpush1.xpose.msra.mxu0 0.0
      %251 = vmatprep.subr.mxu0 0.0
      %252 = vmatpush1.xpose.msra.mxu0 0.0
      %253 = vmatprep.subr.mxu0 0.0
      %254 = vmatpush1.xpose.msra.mxu0 0.0
      %255 = vmatprep.subr.mxu0 0.0
      %256 = vmatpush1.xpose.msra.mxu0 0.0
      %257 = vmatprep.subr.mxu0 0.0
      %258 = vmatpush1.xpose.msra.mxu0 0.0
      %259 = vmatprep.subr.mxu0 0.0
      %260 = vmatpush1.xpose.msra.mxu0 0.0
      %261 = vmatprep.subr.mxu0 0.0
      %262 = vmatpush1.xpose.msra.mxu0 0.0
      %263 = vmatprep.subr.mxu0 0.0
      %264 = vmatpush1.xpose.msra.mxu0 0.0
      %265 = vmatprep.subr.mxu0 0.0
      %266 = vmatpush1.xpose.msra.mxu0 0.0
      %267 = vmatprep.subr.mxu0 0.0
      %268 = vmatpush1.xpose.msra.mxu0 0.0
      %269 = vmatprep.subr.mxu0 0.0
      %270 = vmatpush1.xpose.msra.mxu0 0.0
      %271 = vmatprep.subr.mxu0 0.0
      %272 = vmatpush1.xpose.msra.mxu0 0.0
      %273 = vmatprep.subr.mxu0 0.0
      %274 = vmatpush1.xpose.msra.mxu0 0.0
      %275 = vmatprep.subr.mxu0 0.0
      %276 = vmatpush1.xpose.msra.mxu0 0.0
      %277 = vmatprep.subr.mxu0 0.0
      %278 = vmatpush1.xpose.msra.mxu0 0.0
      %279 = vmatprep.subr.mxu0 0.0
      %280 = vmatpush1.xpose.msra.mxu0 0.0
      %281 = vmatprep.subr.mxu0 0.0
      %282 = vmatpush1.xpose.msra.mxu0 0.0
      %283 = vmatprep.subr.mxu0 0.0
      %284 = vmatpush1.xpose.msra.mxu0 0.0
      %285 = vmatprep.subr.mxu0 0.0
      %286 = vmatpush1.xpose.msra.mxu0 0.0
      %287 = vmatprep.subr.mxu0 0.0
      %288 = vmatpush1.xpose.msra.mxu0 0.0
      %289 = vmatprep.subr.mxu0 0.0
      %290 = vmatpush1.xpose.msra.mxu0 0.0
      %291 = vmatprep.subr.mxu0 0.0
      %292 = vmatpush1.xpose.msra.mxu0 0.0
      %293 = vmatprep.mubr.f32.mxu0 0.0
      %294 = vmatmul.mubr.f32.gmra.mrb[0].mxu0 %v225
      %v295 = vpop.f32.mrb[0].mxu0
      %v296 = vadd.f32 0.0, %v295
      %v297 = vpop.f32.mrb[0].mxu0
      %298 = vdwg.mxu0
      %299 = vrot.lane.b32.xlu0 %v219, 126
      %v300 = vpop.permute.xlu0 %299
      %301 = vrot.lane.b32.xlu0 %v216, 122
      %v302 = vpop.permute.xlu0 %301
      %v303 = vsel %vm223, %v300, 0
      %v305 = vsel %vm223, %v302, 0
      %307 = vmatprep.subr.mxu0 0.0
      %308 = vmatpush1.xpose.msra.mxu0 %v305
      %309 = vmatprep.subr.mxu0 0.0
      %310 = vmatpush1.xpose.msra.mxu0 0.0
      %311 = vmatprep.subr.mxu0 0.0
      %312 = vmatpush1.xpose.msra.mxu0 0.0
      %313 = vmatprep.subr.mxu0 0.0
      %314 = vmatpush1.xpose.msra.mxu0 0.0
      %315 = vmatprep.subr.mxu0 0.0
      %316 = vmatpush1.xpose.msra.mxu0 0.0
      %317 = vmatprep.subr.mxu0 0.0
      %318 = vmatpush1.xpose.msra.mxu0 0.0
      %319 = vmatprep.subr.mxu0 0.0
      %320 = vmatpush1.xpose.msra.mxu0 0.0
      %321 = vmatprep.subr.mxu0 0.0
      %322 = vmatpush1.xpose.msra.mxu0 0.0
      %323 = vmatprep.subr.mxu0 0.0
      %324 = vmatpush1.xpose.msra.mxu0 0.0
      %325 = vmatprep.subr.mxu0 0.0
      %326 = vmatpush1.xpose.msra.mxu0 0.0
      %327 = vmatprep.subr.mxu0 0.0
      %328 = vmatpush1.xpose.msra.mxu0 0.0
      %329 = vmatprep.subr.mxu0 0.0
      %330 = vmatpush1.xpose.msra.mxu0 0.0
      %331 = vmatprep.subr.mxu0 0.0
      %332 = vmatpush1.xpose.msra.mxu0 0.0
      %333 = vmatprep.subr.mxu0 0.0
      %334 = vmatpush1.xpose.msra.mxu0 0.0
      %335 = vmatprep.subr.mxu0 0.0
      %336 = vmatpush1.xpose.msra.mxu0 0.0
      %337 = vmatprep.subr.mxu0 0.0
      %338 = vmatpush1.xpose.msra.mxu0 0.0
      %339 = vmatprep.subr.mxu0 0.0
      %340 = vmatpush1.xpose.msra.mxu0 0.0
      %341 = vmatprep.subr.mxu0 0.0
      %342 = vmatpush1.xpose.msra.mxu0 0.0
      %343 = vmatprep.subr.mxu0 0.0
      %344 = vmatpush1.xpose.msra.mxu0 0.0
      %345 = vmatprep.subr.mxu0 0.0
      %346 = vmatpush1.xpose.msra.mxu0 0.0
      %347 = vmatprep.subr.mxu0 0.0
      %348 = vmatpush1.xpose.msra.mxu0 0.0
      %349 = vmatprep.subr.mxu0 0.0
      %350 = vmatpush1.xpose.msra.mxu0 0.0
      %351 = vmatprep.subr.mxu0 0.0
      %352 = vmatpush1.xpose.msra.mxu0 0.0
      %353 = vmatprep.subr.mxu0 0.0
      %354 = vmatpush1.xpose.msra.mxu0 0.0
      %355 = vmatprep.subr.mxu0 0.0
      %356 = vmatpush1.xpose.msra.mxu0 0.0
      %357 = vmatprep.subr.mxu0 0.0
      %358 = vmatpush1.xpose.msra.mxu0 0.0
      %359 = vmatprep.subr.mxu0 0.0
      %360 = vmatpush1.xpose.msra.mxu0 0.0
      %361 = vmatprep.subr.mxu0 0.0
      %362 = vmatpush1.xpose.msra.mxu0 0.0
      %363 = vmatprep.subr.mxu0 0.0
      %364 = vmatpush1.xpose.msra.mxu0 0.0
      %365 = vmatprep.subr.mxu0 0.0
      %366 = vmatpush1.xpose.msra.mxu0 0.0
      %367 = vmatprep.subr.mxu0 0.0
      %368 = vmatpush1.xpose.msra.mxu0 0.0
      %369 = vmatprep.subr.mxu0 0.0
      %370 = vmatpush1.xpose.msra.mxu0 0.0
      %371 = vmatprep.mubr.f32.mxu0 0.0
      %372 = vmatmul.mubr.f32.gmra.mrb[0].mxu0 %v303
      %v373 = vpop.f32.mrb[0].mxu0
      %v374 = vadd.f32 0.0, %v373
      %v375 = vpop.f32.mrb[0].mxu0
      %376 = vdwg.mxu0
      %v378 = vrot.slane %v374, 2
      %vm380 = vcmask 1045504
      %v381 = vsel %vm380, %v296, %v378
      %v382 = vlaneseq
      %v383 = vshrl.u32 %v382, 7
      %v384 = vadd.s32 %v383, 8
      %vm385 = vcmp.lt.s32.totalorder %v383, 0
      %v386 = vsub.s32 0, %v383
      %v387 = vsel %vm385, %v386, %v383
      %v388 = vmul.u32.u64.compose %v387, 2863311531
      %v389 = vextract.low.u32 %v388
      %v390 = vextract.high.u32 %v388
      %v391 = vshrl.u32 %v390, 2
      %v392 = vmul.u32 %v391, 6
      %v393 = vsub.s32 %v387, %v392
      %v394 = vsub.s32 0, %v393
      %v395 = vsel %vm385, %v394, %v393
      %vm396 = vcmp.lt.s32.totalorder %v384, 0
      %v397 = vsub.s32 0, %v384
      %v398 = vsel %vm396, %v397, %v384
      %v399 = vmul.u32.u64.compose %v398, 2863311531
      %v400 = vextract.low.u32 %v399
      %v401 = vextract.high.u32 %v399
      %v402 = vshrl.u32 %v401, 2
      %v403 = vmul.u32 %v402, 6
      %v404 = vsub.s32 %v398, %v403
      %v405 = vsub.s32 0, %v404
      %v406 = vsel %vm396, %v405, %v404
      %vm407 = vcmp.ne.s32.totalorder %v395, 0
      %vm408 = vcmp.ne.s32.totalorder %v406, 0
      %vm409 = vcmp.lt.s32.totalorder %v395, 0
      %vm410 = vcmp.lt.s32.totalorder %v406, 0
      %vm411 = vmand %vm409, %vm407
      %vm412 = vmand %vm410, %vm408
      %v413 = vadd.s32 %v395, 6
      %v414 = vadd.s32 %v406, 6
      %v415 = vsel %vm411, %v413, %v395
      %v416 = vsel %vm412, %v414, %v406
      %v417 = vlaneseq
      %v418 = vand.u32 %v417, 127
      %vm419 = vcmp.gt.s32.totalorder %v418, %v415
      %vm420 = vcmp.gt.s32.totalorder %v418, %v416
      %v421 = vsel %vm419, -inf, %v381
      %v422 = vsel %vm420, -inf, %v378
      %vm423 = vcmask 48128
      %v424 = vsel %vm423, %v421, -inf
      %425 = vmax.xlane.f32.xlu0 %v424
      %v426 = vpop.xlane.xlu0 %425
      %vm427 = vcmask 44032
      %v428 = vsel %vm427, %v422, -inf
      %429 = vmax.xlane.f32.xlu0 %v428
      %v430 = vpop.xlane.xlu0 %429
      %v431 = vsub.f32 %v421, %v426
      %v432 = vsub.f32 %v422, %v430
      %v433 = vmul.f32 %v431, 1.442695
      %v434 = vpow.pop %v433
      %v435 = vmul.f32 %v432, 1.442695
      %v436 = vpow.pop %v435
      %v437 = vsel %vm423, %v434, 0.0
      %438 = vadd.xlane.f32.xlu0 %v437
      %v439 = vpop.xlane.xlu0 %438
      %v440 = vsel %vm427, %v436, 0.0
      %441 = vadd.xlane.f32.xlu0 %v440
      %v442 = vpop.xlane.xlu0 %441
      %v443 = vrcp.pop %v439
      %v444 = vrcp.pop %v442
      %v445 = vmul.f32 %v434, %v443
      %v446 = vmul.f32 %v436, %v444
      %447 = vrot.lane.b32.xlu0 %v216, 120
      %v448 = vpop.permute.xlu0 %447
      %v450 = vsel %vm423, %v445, 0
      %v452 = vsel %vm380, %v448, 0
      %454 = vmatprep.subr.mxu0 0.0
      %455 = vmatpush1.msra.mxu0 %v452
      %456 = vmatprep.subr.mxu0 0.0
      %457 = vmatpush1.msra.mxu0 0.0
      %458 = vmatprep.subr.mxu0 0.0
      %459 = vmatpush1.msra.mxu0 0.0
      %460 = vmatprep.subr.mxu0 0.0
      %461 = vmatpush1.msra.mxu0 0.0
      %462 = vmatprep.subr.mxu0 0.0
      %463 = vmatpush1.msra.mxu0 0.0
      %464 = vmatprep.subr.mxu0 0.0
      %465 = vmatpush1.msra.mxu0 0.0
      %466 = vmatprep.subr.mxu0 0.0
      %467 = vmatpush1.msra.mxu0 0.0
      %468 = vmatprep.subr.mxu0 0.0
      %469 = vmatpush1.msra.mxu0 0.0
      %470 = vmatprep.subr.mxu0 0.0
      %471 = vmatpush1.msra.mxu0 0.0
      %472 = vmatprep.subr.mxu0 0.0
      %473 = vmatpush1.msra.mxu0 0.0
      %474 = vmatprep.subr.mxu0 0.0
      %475 = vmatpush1.msra.mxu0 0.0
      %476 = vmatprep.subr.mxu0 0.0
      %477 = vmatpush1.msra.mxu0 0.0
      %478 = vmatprep.subr.mxu0 0.0
      %479 = vmatpush1.msra.mxu0 0.0
      %480 = vmatprep.subr.mxu0 0.0
      %481 = vmatpush1.msra.mxu0 0.0
      %482 = vmatprep.subr.mxu0 0.0
      %483 = vmatpush1.msra.mxu0 0.0
      %484 = vmatprep.subr.mxu0 0.0
      %485 = vmatpush1.msra.mxu0 0.0
      %486 = vmatprep.subr.mxu0 0.0
      %487 = vmatpush1.msra.mxu0 0.0
      %488 = vmatprep.subr.mxu0 0.0
      %489 = vmatpush1.msra.mxu0 0.0
      %490 = vmatprep.subr.mxu0 0.0
      %491 = vmatpush1.msra.mxu0 0.0
      %492 = vmatprep.subr.mxu0 0.0
      %493 = vmatpush1.msra.mxu0 0.0
      %494 = vmatprep.subr.mxu0 0.0
      %495 = vmatpush1.msra.mxu0 0.0
      %496 = vmatprep.subr.mxu0 0.0
      %497 = vmatpush1.msra.mxu0 0.0
      %498 = vmatprep.subr.mxu0 0.0
      %499 = vmatpush1.msra.mxu0 0.0
      %500 = vmatprep.subr.mxu0 0.0
      %501 = vmatpush1.msra.mxu0 0.0
      %502 = vmatprep.subr.mxu0 0.0
      %503 = vmatpush1.msra.mxu0 0.0
      %504 = vmatprep.subr.mxu0 0.0
      %505 = vmatpush1.msra.mxu0 0.0
      %506 = vmatprep.subr.mxu0 0.0
      %507 = vmatpush1.msra.mxu0 0.0
      %508 = vmatprep.subr.mxu0 0.0
      %509 = vmatpush1.msra.mxu0 0.0
      %510 = vmatprep.subr.mxu0 0.0
      %511 = vmatpush1.msra.mxu0 0.0
      %512 = vmatprep.subr.mxu0 0.0
      %513 = vmatpush1.msra.mxu0 0.0
      %514 = vmatprep.subr.mxu0 0.0
      %515 = vmatpush1.msra.mxu0 0.0
      %516 = vmatprep.subr.mxu0 0.0
      %517 = vmatpush1.msra.mxu0 0.0
      %518 = vmatprep.mubr.f32.mxu0 0.0
      %519 = vmatmul.mubr.f32.gmra.mrb[0].mxu0 %v450
      %v520 = vpop.f32.mrb[0].mxu0
      %v521 = vadd.f32 0.0, %v520
      %v522 = vpop.f32.mrb[0].mxu0
      %523 = vdwg.mxu0
      %vm525 = vcmask 1041408
      %v526 = vrot.slane %v445, 6
      %v527 = vrot.slane %v446, 6
      %v528 = vsel %vm525, %v526, %v527
      %529 = vrot.lane.b32.xlu0 %v216, 118
      %v530 = vpop.permute.xlu0 %529
      %v531 = vsel %vm423, %v528, 0
      %v533 = vsel %vm380, %v530, 0
      %535 = vmatprep.subr.mxu0 0.0
      %536 = vmatpush1.msra.mxu0 %v533
      %537 = vmatprep.subr.mxu0 0.0
      %538 = vmatpush1.msra.mxu0 0.0
      %539 = vmatprep.subr.mxu0 0.0
      %540 = vmatpush1.msra.mxu0 0.0
      %541 = vmatprep.subr.mxu0 0.0
      %542 = vmatpush1.msra.mxu0 0.0
      %543 = vmatprep.subr.mxu0 0.0
      %544 = vmatpush1.msra.mxu0 0.0
      %545 = vmatprep.subr.mxu0 0.0
      %546 = vmatpush1.msra.mxu0 0.0
      %547 = vmatprep.subr.mxu0 0.0
      %548 = vmatpush1.msra.mxu0 0.0
      %549 = vmatprep.subr.mxu0 0.0
      %550 = vmatpush1.msra.mxu0 0.0
      %551 = vmatprep.subr.mxu0 0.0
      %552 = vmatpush1.msra.mxu0 0.0
      %553 = vmatprep.subr.mxu0 0.0
      %554 = vmatpush1.msra.mxu0 0.0
      %555 = vmatprep.subr.mxu0 0.0
      %556 = vmatpush1.msra.mxu0 0.0
      %557 = vmatprep.subr.mxu0 0.0
      %558 = vmatpush1.msra.mxu0 0.0
      %559 = vmatprep.subr.mxu0 0.0
      %560 = vmatpush1.msra.mxu0 0.0
      %561 = vmatprep.subr.mxu0 0.0
      %562 = vmatpush1.msra.mxu0 0.0
      %563 = vmatprep.subr.mxu0 0.0
      %564 = vmatpush1.msra.mxu0 0.0
      %565 = vmatprep.subr.mxu0 0.0
      %566 = vmatpush1.msra.mxu0 0.0
      %567 = vmatprep.subr.mxu0 0.0
      %568 = vmatpush1.msra.mxu0 0.0
      %569 = vmatprep.subr.mxu0 0.0
      %570 = vmatpush1.msra.mxu0 0.0
      %571 = vmatprep.subr.mxu0 0.0
      %572 = vmatpush1.msra.mxu0 0.0
      %573 = vmatprep.subr.mxu0 0.0
      %574 = vmatpush1.msra.mxu0 0.0
      %575 = vmatprep.subr.mxu0 0.0
      %576 = vmatpush1.msra.mxu0 0.0
      %577 = vmatprep.subr.mxu0 0.0
      %578 = vmatpush1.msra.mxu0 0.0
      %579 = vmatprep.subr.mxu0 0.0
      %580 = vmatpush1.msra.mxu0 0.0
      %581 = vmatprep.subr.mxu0 0.0
      %582 = vmatpush1.msra.mxu0 0.0
      %583 = vmatprep.subr.mxu0 0.0
      %584 = vmatpush1.msra.mxu0 0.0
      %585 = vmatprep.subr.mxu0 0.0
      %586 = vmatpush1.msra.mxu0 0.0
      %587 = vmatprep.subr.mxu0 0.0
      %588 = vmatpush1.msra.mxu0 0.0
      %589 = vmatprep.subr.mxu0 0.0
      %590 = vmatpush1.msra.mxu0 0.0
      %591 = vmatprep.subr.mxu0 0.0
      %592 = vmatpush1.msra.mxu0 0.0
      %593 = vmatprep.subr.mxu0 0.0
      %594 = vmatpush1.msra.mxu0 0.0
      %595 = vmatprep.subr.mxu0 0.0
      %596 = vmatpush1.msra.mxu0 0.0
      %597 = vmatprep.subr.mxu0 0.0
      %598 = vmatpush1.msra.mxu0 0.0
      %599 = vmatprep.mubr.f32.mxu0 0.0
      %600 = vmatmul.mubr.f32.gmra.mrb[0].mxu0 %v531
      %v601 = vpop.f32.mrb[0].mxu0
      %v602 = vadd.f32 0.0, %v601
      %v603 = vpop.f32.mrb[0].mxu0
      %604 = vdwg.mxu0
      %606 = vrot.lane.b32.xlu0 %v602, 2
      %v607 = vpop.permute.xlu0 %606
      %v609 = vsel %vm223, %v521, %v607
      %vm610 = vcmask 29696
      %611 = vst.msk [vmem:[%s138] sm:$0x3f] %vm610, %v609
      %p612 = scmp.lt.s32.totalorder %s13, 1
      %s613 = scalar_select %p612, %s13, 1
      %s614 = smul.addr %s613, 8
      %s615 = scalar_lea.vmem %s2, %s614
      // Predicated region
      $region29: #{tpu_custom_call.1} parent=27 // pred_check
        %p616 = pneg %p78
      $region30: #{tpu_custom_call.1} parent=27 // pred_check_branch
        %618 = sbr.rel (%p616) target = $region32
      $region31: #{tpu_custom_call.1} parent=27 // pred_region
        _
      $region32: #{tpu_custom_call.1} parent=27 // pred_fallthru
        _
    $region28: #{tpu_custom_call.1} parent=5 // pred_fallthru
      _
    %p619 = scmp.le.s32.totalorder 2, %s8
    // Predicated region
    $region33: #{tpu_custom_call.1} parent=5 // pred_check
      %p620 = pneg %p619
    $region34: #{tpu_custom_call.1} parent=5 // pred_check_branch
      %622 = sbr.rel (%p620) target = $region36
    $region35: #{tpu_custom_call.1} parent=5 // pred_region
      %s623 = ssub.s32 %s8, 2
      // Predicated region
      $region37: #{tpu_custom_call.1} parent=35 // pred_check
        %p624 = pneg %p84
      $region38: #{tpu_custom_call.1} parent=35 // pred_check_branch
        %626 = sbr.rel (%p624) target = $region40
      $region39: #{tpu_custom_call.1} parent=35 // pred_region
        %p627 = scmp.lt.s32.totalorder %s14, 1
        %s628 = scalar_select %p627, %s14, 1
        %s629 = smul.addr %s628, 8
        %s630 = scalar_lea.vmem %s2, %s629
      $region40: #{tpu_custom_call.1} parent=35 // pred_fallthru
        _
    $region36: #{tpu_custom_call.1} parent=5 // pred_fallthru
      _
  $region6: #{tpu_custom_call.1} parent=0 // loop_footer
    %s12 = sadd.s32 1, %s8
  $region7: #{tpu_custom_call.1} parent=0 // loop_footer_branch
    %7 = sbr.rel target = $region3
  $region8: #{tpu_custom_call.1} parent=0 // loop_exit
    _

</llo_original>
